<compile_context>
chip_gen: v5e
topology: v5e:2x2
jax: 0.10.0
libtpu: 0.0.40
codegen_flags: <defaults>
</compile_context>

<pallas_src>
import functools

import jax
import jax.numpy as jnp
from jax.experimental import pallas as pl
from jax.experimental.pallas import tpu as pltpu

_LANE_W = 1024            # lane-dense last dim, large multiple of 128
_MIN_PALLAS_ELEMS = 65536  # below this, plain jnp beats a kernel launch


def _round_up(a: int, b: int) -> int:
    return ((a + b - 1) // b) * b


def _apply_tone_map(x, mode, eps, bound):
    """Elementwise tone-map math in f32, constants folded at trace time."""
    xf = x.astype(jnp.float32)
    if mode == "gamma":
        inv_scale = 1.0 / (1.0 - 2.0 * bound)          # folded: mul not div
        y = jnp.maximum((xf - bound) * inv_scale, eps)
        return y ** (1.0 / 2.2)
    elif mode == "reverse_gamma":
        scale = 1.0 - 2.0 * bound
        y = jnp.maximum(xf, eps)
        return (y ** 2.2) * scale + bound
    return xf  # identity (handled in wrapper; kept for completeness)


def _tone_mapping_kernel(x_ref, o_ref, *, mode, eps, bound):
    o_ref[...] = _apply_tone_map(x_ref[...], mode, eps, bound).astype(o_ref.dtype)


def _tile_params():
    """Return (target tile rows, scoped-VMEM budget in bytes), chip-aware."""
    try:
        vmem_cap = int(getattr(pltpu.get_tpu_info(), "vmem_capacity_bytes", 0) or 0)
    except Exception:
        vmem_cap = 0
    if vmem_cap >= 96 * 1024 * 1024:
        # v5e / v6e: 128 MiB VMEM — bigger tiles, fewer grid steps.
        return 1024, 48 * 1024 * 1024
    # v7x (64 MiB VMEM) or unknown: conservative budget, 2 MiB f32 tiles.
    return 512, 32 * 1024 * 1024


def tone_mapping(x, tone_mapping_type: str, eps: float = 1e-8, bound: float = 0.0,
                 min_pallas_elements: int = _MIN_PALLAS_ELEMS):
    """Pallas TPU implementation of ToneMapping.forward (elementwise)."""
    if tone_mapping_type in ("identity", "reverse_identity"):
        return x  # free: no HBM round-trip
    if tone_mapping_type not in ("gamma", "reverse_gamma"):
        raise NotImplementedError("Unknown tone mapping type.")

    eps = float(eps)
    bound = float(bound)
    orig_shape = x.shape
    total = 1
    for d in orig_shape:
        total *= int(d)

    # Tiny inputs: custom-call launch + layout glue cost more than the work.
    if total < min_pallas_elements:
        return _apply_tone_map(x, tone_mapping_type, eps, bound).astype(x.dtype)

    rows = pl.cdiv(total, _LANE_W)
    target_rows, vmem_budget = _tile_params()

    # ---- tile / grid selection ------------------------------------------
    # Ragged last block is handled by Pallas edge masking, so no dead row
    # padding.  Even block count balances v7x's two TensorCores.
    n_blocks = max(2, pl.cdiv(rows, target_rows))
    if n_blocks % 2:
        n_blocks += 1
    tile_r = min(target_rows, _round_up(pl.cdiv(rows, n_blocks), 8))
    grid_rows = pl.cdiv(rows, tile_r)

    # ---- layout glue (zero-copy reshape when total % 1024 == 0) ----------
    aligned = (total % _LANE_W) == 0
    flat = x.reshape(-1)
    if not aligned:
        # Fallback: pad < 1024 elements with 1.0 (safe under clamp/pow),
        # sliced off after the kernel.
        flat = jnp.pad(flat, (0, rows * _LANE_W - total), constant_values=1.0)
    x2d = flat.reshape(rows, _LANE_W)

    kernel = functools.partial(
        _tone_mapping_kernel, mode=tone_mapping_type, eps=eps, bound=bound)

    tile_bytes = tile_r * _LANE_W * x.dtype.itemsize
    # double-buffered input + double-buffered output + headroom
    vmem_limit = min(vmem_budget, max(8 * 1024 * 1024, 6 * tile_bytes))

    out2d = pl.pallas_call(
        kernel,
        out_shape=jax.ShapeDtypeStruct((rows, _LANE_W), x.dtype),
        grid_spec=pltpu.PrefetchScalarGridSpec(
            num_scalar_prefetch=0,
            grid=(grid_rows,),
            in_specs=[pl.BlockSpec((tile_r, _LANE_W), lambda i: (i, 0))],
            out_specs=pl.BlockSpec((tile_r, _LANE_W), lambda i: (i, 0)),
        ),
        compiler_params=pltpu.CompilerParams(
            dimension_semantics=("parallel",),
            vmem_limit_bytes=vmem_limit,
        ),
    )(x2d)

    out_flat = out2d.reshape(-1)
    if not aligned:
        out_flat = out_flat[:total]
    return out_flat.reshape(orig_shape)


def _reference(x, tone_mapping_type, eps=1e-8, bound=0.0):
    if tone_mapping_type == "gamma":
        return jnp.maximum((x - bound) / (1.0 - 2.0 * bound), eps) ** (1.0 / 2.2)
    elif tone_mapping_type == "reverse_gamma":
        return (jnp.maximum(x, eps) ** 2.2) * (1.0 - 2.0 * bound) + bound
    elif tone_mapping_type in ("identity", "reverse_identity"):
        return x
    else:
        raise NotImplementedError


if __name__ == "__main__":
    key = jax.random.PRNGKey(0)
    k1, k2, k3 = jax.random.split(key, 3)

    # Small NCHW input (module-scale): exercises the jnp fast path.
    x_small = jax.random.uniform(k1, (2, 4, 16, 16), dtype=jnp.float32)
    # 1024-aligned total: zero-copy Pallas path, 2-block parallel grid.
    x_aligned = jax.random.uniform(k2, (2, 4, 128, 128), dtype=jnp.float32)
    # Unaligned total: small-pad fallback + ragged last block.
    x_ragged = jax.random.uniform(k3, (2, 3, 100, 130), dtype=jnp.float32)

    ok = True
    for x in (x_small, x_aligned, x_ragged):
        for mode, bound in [
            ("gamma", 0.0),
            ("gamma", 0.05),
            ("reverse_gamma", 0.05),
            ("identity", 0.0),
            ("reverse_identity", 0.0),
        ]:
            out = tone_mapping(x, mode, eps=1e-8, bound=bound)
            out = jax.block_until_ready(out)
            ref = _reference(x, mode, eps=1e-8, bound=bound)
            if out.shape != x.shape or not jnp.allclose(out, ref, atol=1e-5, rtol=1e-5):
                ok = False
                print(f"MISMATCH for shape={x.shape}, mode={mode}, bound={bound}")

    if ok:
        print("KERNEL_OK")
</pallas_src>

<mosaic_0001>
module attributes {stable_mosaic.version = 11 : i64} {
  func.func @_tone_mapping_kernel(%arg0: i32, %arg1: memref<64x1024xf32, #tpu.memory_space<vmem>>, %arg2: memref<64x1024xf32, #tpu.memory_space<vmem>>) attributes {dimension_semantics = [#tpu.dimension_semantics<parallel>], iteration_bounds = array<i64: 2>, scalar_prefetch = 0 : i64, scratch_operands = 0 : i64, tpu.core_type = #tpu.core_type<tc>, window_params = [{transform_indices = @transform_0, window_bounds = array<i64: 64, 1024>}, {transform_indices = @transform_1, window_bounds = array<i64: 64, 1024>}]} {
    %c0 = arith.constant 0 : index
    %c0_0 = arith.constant 0 : index
    %0 = vector.load %arg1[%c0, %c0_0] : memref<64x1024xf32, #tpu.memory_space<vmem>>, vector<64x1024xf32>
    %cst = arith.constant 0.000000e+00 : f32
    %1 = vector.broadcast %cst : f32 to vector<64x1024xf32>
    %2 = arith.subf %0, %1 : vector<64x1024xf32>
    %cst_1 = arith.constant 1.000000e+00 : f32
    %3 = vector.broadcast %cst_1 : f32 to vector<64x1024xf32>
    %4 = arith.mulf %2, %3 : vector<64x1024xf32>
    %cst_2 = arith.constant 9.99999993E-9 : f32
    %5 = vector.broadcast %cst_2 : f32 to vector<64x1024xf32>
    %6 = arith.maximumf %4, %5 : vector<64x1024xf32>
    %cst_3 = arith.constant 0.454545468 : f32
    %7 = vector.broadcast %cst_3 : f32 to vector<64x1024xf32>
    %8 = math.powf %6, %7 : vector<64x1024xf32>
    %c0_4 = arith.constant 0 : index
    %c0_5 = arith.constant 0 : index
    %9 = vector.load %arg2[%c0_4, %c0_5] : memref<64x1024xf32, #tpu.memory_space<vmem>>, vector<64x1024xf32>
    tpu.vector_store %arg2[%c0_4, %c0_5], %8 {strides = array<i32>} : memref<64x1024xf32, #tpu.memory_space<vmem>>, vector<64x1024xf32>,
    return
  }
  func.func @transform_0(%arg0: i32) -> (i32, i32) {
    %c0_i32 = arith.constant 0 : i32
    %c0_i32_0 = arith.constant 0 : i32
    return %arg0, %c0_i32 : i32, i32
  }
  func.func @transform_1(%arg0: i32) -> (i32, i32) {
    %c0_i32 = arith.constant 0 : i32
    %c0_i32_0 = arith.constant 0 : i32
    return %arg0, %c0_i32 : i32, i32
  }
}

</mosaic_0001>

<llo_original>
// kernel: tpu_custom_call.1
$region0: #{tpu_custom_call.1}
  #allocation0 [shape = 'u32[]', space=smem, size = 0x4, offset = 0x4, fixed_abs, tag = 'smem constant byte address 0x4 - core index']
  #allocation1 [shape = 'u32[72,128]{1,0:T(1,128)}', space=vmem, size = 0x9000, scoped, tag = 'internal scratch']
  %s0 = inlined_call_operand.hbm [shape: f32[128,1024], index: 0, kind: input, shape index: {}]
  %s1 = inlined_call_operand.hbm [shape: f32[128,1024], index: 1, kind: output, shape index: {}]
  %s2 = sld [smem:[#allocation0]]
  $region41: #{tpu_custom_call.1} parent=0
    _
  %s4 = ssub.s32 1, %s2
  %s5 = scalar_select 0, %s4, %s2
  $region1: #{tpu_custom_call.1} parent=0
    #allocation2 [shape = 'u8[524288]{0}', space=vmem, size = 0x80000, scoped, tag = 'input window, operand 0']
    #allocation3 [shape = 's32[2]{0}', space=sflag, size = 0x8, scoped, tag = 'scoped memory for tpu_custom_call.1']
    #allocation4 [shape = 's32[2]{0}', space=sflag, size = 0x8, scoped, tag = 'scoped memory for tpu_custom_call.1']
    #allocation5 [shape = 'u8[524288]{0}', space=vmem, size = 0x80000, scoped, tag = 'output window, operand 0']
    %6 = vsyncpa [#allocation3], 0
    %s7 = scalar_lea.sflag [#allocation3], 1
    %8 = vsyncpa %s7, 0
    %9 = vsyncpa [#allocation4], 0
    %s10 = scalar_lea.sflag [#allocation4], 1
    %11 = vsyncpa %s10, 0
    loop: start=0, step=1, limit=4
    $region2: #{tpu_custom_call.1} parent=1 // loop_pre_header
      _
    $region3: #{tpu_custom_call.1} parent=1 // loop_header
      %s13 = sphi 0, %s17
      %p14 = scmp.ge.s32.totalorder %s13, 4
      %s23 = sphi 0, %s25
      %s26 = sphi 0, %s23
      %s27 = sphi 0, %s26
      %s43 = sphi 0, %s27
      %s49 = sphi 0, %s51
      %s52 = sphi 0, %s49
      %s53 = sphi 0, %s52
      %s69 = sphi 0, %s53
    $region4: #{tpu_custom_call.1} parent=1 // loop_header_branch
      %16 = sbr.rel (%p14) target = $region8
    $region5: #{tpu_custom_call.1} parent=1 // loop_body
      %s18 = ssub.s32 %s13, 1
      %s19 = ssub.s32 %s13, 2
      %s20 = sadd.s32 %s13, 1
      %s21 = ssub.s32 %s13, %s20
      %p22 = scmp.eq.s32.totalorder %s21, 0
      %s24 = sadd.s32 %s23, 1
      %s25 = scalar_select %p22, %s23, %s24
      %p28 = pneg %p22
      %p29 = scmp.eq.s32.totalorder %s13, 1
      %p30 = por %p28, %p29
      %p31 = scmp.ne.s32.totalorder %s23, %s26
      %p32 = scmp.eq.s32.totalorder %s13, 0
      %p33 = por %p31, %p32
      %p34 = scmp.ne.s32.totalorder %s23, %s26
      %p35 = scmp.eq.s32.totalorder %s18, 1
      %p36 = por %p34, %p35
      %p37 = scmp.ne.s32.totalorder %s26, %s27
      %p38 = scmp.eq.s32.totalorder %s18, 0
      %p39 = por %p37, %p38
      %p40 = scmp.ne.s32.totalorder %s26, %s27
      %p41 = scmp.eq.s32.totalorder %s19, 1
      %p42 = por %p40, %p41
      %p44 = scmp.ne.s32.totalorder %s27, %s43
      %p45 = scmp.eq.s32.totalorder %s19, 0
      %p46 = por %p44, %p45
      %s47 = ssub.s32 %s13, %s20
      %p48 = scmp.eq.s32.totalorder %s47, 0
      %s50 = sadd.s32 %s49, 1
      %s51 = scalar_select %p48, %s49, %s50
      %p54 = pneg %p48
      %p55 = scmp.eq.s32.totalorder %s13, 1
      %p56 = por %p54, %p55
      %p57 = scmp.ne.s32.totalorder %s49, %s52
      %p58 = scmp.eq.s32.totalorder %s13, 0
      %p59 = por %p57, %p58
      %p60 = scmp.ne.s32.totalorder %s49, %s52
      %p61 = scmp.eq.s32.totalorder %s18, 1
      %p62 = por %p60, %p61
      %p63 = scmp.ne.s32.totalorder %s52, %s53
      %p64 = scmp.eq.s32.totalorder %s18, 0
      %p65 = por %p63, %p64
      %p66 = scmp.ne.s32.totalorder %s52, %s53
      %p67 = scmp.eq.s32.totalorder %s19, 1
      %p68 = por %p66, %p67
      %p70 = scmp.ne.s32.totalorder %s53, %s69
      %p71 = scmp.eq.s32.totalorder %s19, 0
      %p72 = por %p70, %p71
      %p73 = scmp.le.s32.totalorder 1, %s13
      %p74 = scmp.lt.s32.totalorder %s13, 3
      %p75 = pnand %p73, %p74
      %p76 = pneg %p75
      // Predicated region
      $region9: #{tpu_custom_call.1} parent=5 // pred_check
        _
      $region10: #{tpu_custom_call.1} parent=5 // pred_check_branch
        %78 = sbr.rel (%p75) target = $region12
      $region11: #{tpu_custom_call.1} parent=5 // pred_region
        %s79 = ssub.s32 %s13, 1
      $region12: #{tpu_custom_call.1} parent=5 // pred_fallthru
        _
      %p80 = scmp.lt.s32.totalorder %s13, 2
      // Predicated region
      $region13: #{tpu_custom_call.1} parent=5 // pred_check
        %p81 = pneg %p80
      $region14: #{tpu_custom_call.1} parent=5 // pred_check_branch
        %83 = sbr.rel (%p81) target = $region16
      $region15: #{tpu_custom_call.1} parent=5 // pred_region
        // Predicated region
        $region17: #{tpu_custom_call.1} parent=15 // pred_check
          %p84 = pneg %p33
        $region18: #{tpu_custom_call.1} parent=15 // pred_check_branch
          %86 = sbr.rel (%p84) target = $region20
        $region19: #{tpu_custom_call.1} parent=15 // pred_region
          %s87 = sand.u32 %s23, 1
          %s88 = scalar_lea.sflag [#allocation3], %s87
          %s89 = sand.u32 %s23, 1
          %s90 = smul.addr %s89, 512
          %s91 = scalar_lea.vmem [#allocation2], %s90
          %s92 = smul.u32 8, %s13
          %94 = vsyncadd %s88, 0
          %s95 = smul.addr %s92, 8
          %s96 = smul.addr %s95, 8
          %s97 = scalar_lea.hbm %s0, %s96
          %s98 = sshll.u32 %s97, 4
          %s99 = int_to_ptr.hbm [resolvable:$true] %s98
          %s100 = sshll.u32 %s91, 4
          %s101 = int_to_ptr.vmem [resolvable:$true] %s100
          %106 = dma.hbm_to_vmem [thread:$0]  %s99, 8192, %s101, %s88, 1024, 1024, 64
        $region20: #{tpu_custom_call.1} parent=15 // pred_fallthru
          _
      $region16: #{tpu_custom_call.1} parent=5 // pred_fallthru
        _
      %p107 = scmp.le.s32.totalorder 1, %s13
      %p108 = scmp.lt.s32.totalorder %s13, 3
      %p109 = pnand %p107, %p108
      %p110 = pneg %p109
      // Predicated region
      $region21: #{tpu_custom_call.1} parent=5 // pred_check
        _
      $region22: #{tpu_custom_call.1} parent=5 // pred_check_branch
        %112 = sbr.rel (%p109) target = $region24
      $region23: #{tpu_custom_call.1} parent=5 // pred_region
        %s113 = ssub.s32 %s13, 1
        %s114 = sand.u32 %s26, 1
        %s115 = scalar_lea.sflag [#allocation3], %s114
        %s116 = sand.u32 %s26, 1
        %s117 = smul.addr %s116, 512
        %s118 = scalar_lea.vmem [#allocation2], %s117
        // Predicated region
        $region25: #{tpu_custom_call.1} parent=23 // pred_check
          %p119 = pneg %p39
        $region26: #{tpu_custom_call.1} parent=23 // pred_check_branch
          %121 = sbr.rel (%p119) target = $region28
        $region27: #{tpu_custom_call.1} parent=23 // pred_region
          %123 = dma.done %s115, 8192
        $region28: #{tpu_custom_call.1} parent=23 // pred_fallthru
          _
        %s124 = sand.u32 %s26, 1
        %s125 = scalar_lea.sflag [#allocation3], %s124
        %s126 = sand.u32 %s26, 1
        %s127 = smul.addr %s126, 512
        %s128 = scalar_lea.vmem [#allocation2], %s127
        %p129 = pneg %p39
        %p130 = pneg %p36
        %p131 = pneg %p65
        %p132 = pneg %p62
        %s133 = sand.u32 %s52, 1
        %s134 = scalar_lea.sflag [#allocation4], %s133
        %s135 = sand.u32 %s52, 1
        %s136 = smul.addr %s135, 512
        %s137 = scalar_lea.vmem [#allocation5], %s136
        %s138 = smul.u32 8, %s18
        %s139 = smul.u32 8, %s18
        %v140 = vld [vmem:[%s118] sm:$0xff]
        %v141 = vld [vmem:[%s118 + $0x8] sm:$0xff]
        %v142 = vld [vmem:[%s118 + $0x10] sm:$0xff]
        %v143 = vld [vmem:[%s118 + $0x18] sm:$0xff]
        %v144 = vld [vmem:[%s118 + $0x20] sm:$0xff]
        %v145 = vld [vmem:[%s118 + $0x28] sm:$0xff]
        %v146 = vld [vmem:[%s118 + $0x30] sm:$0xff]
        %v147 = vld [vmem:[%s118 + $0x38] sm:$0xff]
        %v148 = vld [vmem:[%s118 + $0x40] sm:$0xff]
        %v149 = vld [vmem:[%s118 + $0x48] sm:$0xff]
        %v150 = vld [vmem:[%s118 + $0x50] sm:$0xff]
        %v151 = vld [vmem:[%s118 + $0x58] sm:$0xff]
        %v152 = vld [vmem:[%s118 + $0x60] sm:$0xff]
        %v153 = vld [vmem:[%s118 + $0x68] sm:$0xff]
        %v154 = vld [vmem:[%s118 + $0x70] sm:$0xff]
        %v155 = vld [vmem:[%s118 + $0x78] sm:$0xff]
        %v156 = vld [vmem:[%s118 + $0x80] sm:$0xff]
        %v157 = vld [vmem:[%s118 + $0x88] sm:$0xff]
        %v158 = vld [vmem:[%s118 + $0x90] sm:$0xff]
        %v159 = vld [vmem:[%s118 + $0x98] sm:$0xff]
        %v160 = vld [vmem:[%s118 + $0xa0] sm:$0xff]
        %v161 = vld [vmem:[%s118 + $0xa8] sm:$0xff]
        %v162 = vld [vmem:[%s118 + $0xb0] sm:$0xff]
        %v163 = vld [vmem:[%s118 + $0xb8] sm:$0xff]
        %v164 = vld [vmem:[%s118 + $0xc0] sm:$0xff]
        %v165 = vld [vmem:[%s118 + $0xc8] sm:$0xff]
        %v166 = vld [vmem:[%s118 + $0xd0] sm:$0xff]
        %v167 = vld [vmem:[%s118 + $0xd8] sm:$0xff]
        %v168 = vld [vmem:[%s118 + $0xe0] sm:$0xff]
        %v169 = vld [vmem:[%s118 + $0xe8] sm:$0xff]
        %v170 = vld [vmem:[%s118 + $0xf0] sm:$0xff]
        %v171 = vld [vmem:[%s118 + $0xf8] sm:$0xff]
        %v172 = vld [vmem:[%s118 + $0x100] sm:$0xff]
        %v173 = vld [vmem:[%s118 + $0x108] sm:$0xff]
        %v174 = vld [vmem:[%s118 + $0x110] sm:$0xff]
        %v175 = vld [vmem:[%s118 + $0x118] sm:$0xff]
        %v176 = vld [vmem:[%s118 + $0x120] sm:$0xff]
        %v177 = vld [vmem:[%s118 + $0x128] sm:$0xff]
        %v178 = vld [vmem:[%s118 + $0x130] sm:$0xff]
        %v179 = vld [vmem:[%s118 + $0x138] sm:$0xff]
        %v180 = vld [vmem:[%s118 + $0x140] sm:$0xff]
        %v181 = vld [vmem:[%s118 + $0x148] sm:$0xff]
        %v182 = vld [vmem:[%s118 + $0x150] sm:$0xff]
        %v183 = vld [vmem:[%s118 + $0x158] sm:$0xff]
        %v184 = vld [vmem:[%s118 + $0x160] sm:$0xff]
        %v185 = vld [vmem:[%s118 + $0x168] sm:$0xff]
        %v186 = vld [vmem:[%s118 + $0x170] sm:$0xff]
        %v187 = vld [vmem:[%s118 + $0x178] sm:$0xff]
        %v188 = vld [vmem:[%s118 + $0x180] sm:$0xff]
        %v189 = vld [vmem:[%s118 + $0x188] sm:$0xff]
        %v190 = vld [vmem:[%s118 + $0x190] sm:$0xff]
        %v191 = vld [vmem:[%s118 + $0x198] sm:$0xff]
        %v192 = vld [vmem:[%s118 + $0x1a0] sm:$0xff]
        %v193 = vld [vmem:[%s118 + $0x1a8] sm:$0xff]
        %v194 = vld [vmem:[%s118 + $0x1b0] sm:$0xff]
        %v195 = vld [vmem:[%s118 + $0x1b8] sm:$0xff]
        %v196 = vld [vmem:[%s118 + $0x1c0] sm:$0xff]
        %v197 = vld [vmem:[%s118 + $0x1c8] sm:$0xff]
        %v198 = vld [vmem:[%s118 + $0x1d0] sm:$0xff]
        %v199 = vld [vmem:[%s118 + $0x1d8] sm:$0xff]
        %v200 = vld [vmem:[%s118 + $0x1e0] sm:$0xff]
        %v201 = vld [vmem:[%s118 + $0x1e8] sm:$0xff]
        %v202 = vld [vmem:[%s118 + $0x1f0] sm:$0xff]
        %v203 = vld [vmem:[%s118 + $0x1f8] sm:$0xff]
        %v204 = vmax.f32 %v140, 1e-08
        %v205 = vmax.f32 %v141, 1e-08
        %v206 = vmax.f32 %v142, 1e-08
        %v207 = vmax.f32 %v143, 1e-08
        %v208 = vmax.f32 %v144, 1e-08
        %v209 = vmax.f32 %v145, 1e-08
        %v210 = vmax.f32 %v146, 1e-08
        %v211 = vmax.f32 %v147, 1e-08
        %v212 = vmax.f32 %v148, 1e-08
        %v213 = vmax.f32 %v149, 1e-08
        %v214 = vmax.f32 %v150, 1e-08
        %v215 = vmax.f32 %v151, 1e-08
        %v216 = vmax.f32 %v152, 1e-08
        %v217 = vmax.f32 %v153, 1e-08
        %v218 = vmax.f32 %v154, 1e-08
        %v219 = vmax.f32 %v155, 1e-08
        %v220 = vmax.f32 %v156, 1e-08
        %v221 = vmax.f32 %v157, 1e-08
        %v222 = vmax.f32 %v158, 1e-08
        %v223 = vmax.f32 %v159, 1e-08
        %v224 = vmax.f32 %v160, 1e-08
        %v225 = vmax.f32 %v161, 1e-08
        %v226 = vmax.f32 %v162, 1e-08
        %v227 = vmax.f32 %v163, 1e-08
        %v228 = vmax.f32 %v164, 1e-08
        %v229 = vmax.f32 %v165, 1e-08
        %v230 = vmax.f32 %v166, 1e-08
        %v231 = vmax.f32 %v167, 1e-08
        %v232 = vmax.f32 %v168, 1e-08
        %v233 = vmax.f32 %v169, 1e-08
        %v234 = vmax.f32 %v170, 1e-08
        %v235 = vmax.f32 %v171, 1e-08
        %v236 = vmax.f32 %v172, 1e-08
        %v237 = vmax.f32 %v173, 1e-08
        %v238 = vmax.f32 %v174, 1e-08
        %v239 = vmax.f32 %v175, 1e-08
        %v240 = vmax.f32 %v176, 1e-08
        %v241 = vmax.f32 %v177, 1e-08
        %v242 = vmax.f32 %v178, 1e-08
        %v243 = vmax.f32 %v179, 1e-08
        %v244 = vmax.f32 %v180, 1e-08
        %v245 = vmax.f32 %v181, 1e-08
        %v246 = vmax.f32 %v182, 1e-08
        %v247 = vmax.f32 %v183, 1e-08
        %v248 = vmax.f32 %v184, 1e-08
        %v249 = vmax.f32 %v185, 1e-08
        %v250 = vmax.f32 %v186, 1e-08
        %v251 = vmax.f32 %v187, 1e-08
        %v252 = vmax.f32 %v188, 1e-08
        %v253 = vmax.f32 %v189, 1e-08
        %v254 = vmax.f32 %v190, 1e-08
        %v255 = vmax.f32 %v191, 1e-08
        %v256 = vmax.f32 %v192, 1e-08
        %v257 = vmax.f32 %v193, 1e-08
        %v258 = vmax.f32 %v194, 1e-08
        %v259 = vmax.f32 %v195, 1e-08
        %v260 = vmax.f32 %v196, 1e-08
        %v261 = vmax.f32 %v197, 1e-08
        %v262 = vmax.f32 %v198, 1e-08
        %v263 = vmax.f32 %v199, 1e-08
        %v264 = vmax.f32 %v200, 1e-08
        %v265 = vmax.f32 %v201, 1e-08
        %v266 = vmax.f32 %v202, 1e-08
        %v267 = vmax.f32 %v203, 1e-08
        %v268 = vpow.f32 %v204, 0.45454547
        %v269 = vpow.f32 %v205, 0.45454547
        %v270 = vpow.f32 %v206, 0.45454547
        %v271 = vpow.f32 %v207, 0.45454547
        %v272 = vpow.f32 %v208, 0.45454547
        %v273 = vpow.f32 %v209, 0.45454547
        %v274 = vpow.f32 %v210, 0.45454547
        %v275 = vpow.f32 %v211, 0.45454547
        %v276 = vpow.f32 %v212, 0.45454547
        %v277 = vpow.f32 %v213, 0.45454547
        %v278 = vpow.f32 %v214, 0.45454547
        %v279 = vpow.f32 %v215, 0.45454547
        %v280 = vpow.f32 %v216, 0.45454547
        %v281 = vpow.f32 %v217, 0.45454547
        %v282 = vpow.f32 %v218, 0.45454547
        %v283 = vpow.f32 %v219, 0.45454547
        %v284 = vpow.f32 %v220, 0.45454547
        %v285 = vpow.f32 %v221, 0.45454547
        %v286 = vpow.f32 %v222, 0.45454547
        %v287 = vpow.f32 %v223, 0.45454547
        %v288 = vpow.f32 %v224, 0.45454547
        %v289 = vpow.f32 %v225, 0.45454547
        %v290 = vpow.f32 %v226, 0.45454547
        %v291 = vpow.f32 %v227, 0.45454547
        %v292 = vpow.f32 %v228, 0.45454547
        %v293 = vpow.f32 %v229, 0.45454547
        %v294 = vpow.f32 %v230, 0.45454547
        %v295 = vpow.f32 %v231, 0.45454547
        %v296 = vpow.f32 %v232, 0.45454547
        %v297 = vpow.f32 %v233, 0.45454547
        %v298 = vpow.f32 %v234, 0.45454547
        %v299 = vpow.f32 %v235, 0.45454547
        %v300 = vpow.f32 %v236, 0.45454547
        %v301 = vpow.f32 %v237, 0.45454547
        %v302 = vpow.f32 %v238, 0.45454547
        %v303 = vpow.f32 %v239, 0.45454547
        %v304 = vpow.f32 %v240, 0.45454547
        %v305 = vpow.f32 %v241, 0.45454547
        %v306 = vpow.f32 %v242, 0.45454547
        %v307 = vpow.f32 %v243, 0.45454547
        %v308 = vpow.f32 %v244, 0.45454547
        %v309 = vpow.f32 %v245, 0.45454547
        %v310 = vpow.f32 %v246, 0.45454547
        %v311 = vpow.f32 %v247, 0.45454547
        %v312 = vpow.f32 %v248, 0.45454547
        %v313 = vpow.f32 %v249, 0.45454547
        %v314 = vpow.f32 %v250, 0.45454547
        %v315 = vpow.f32 %v251, 0.45454547
        %v316 = vpow.f32 %v252, 0.45454547
        %v317 = vpow.f32 %v253, 0.45454547
        %v318 = vpow.f32 %v254, 0.45454547
        %v319 = vpow.f32 %v255, 0.45454547
        %v320 = vpow.f32 %v256, 0.45454547
        %v321 = vpow.f32 %v257, 0.45454547
        %v322 = vpow.f32 %v258, 0.45454547
        %v323 = vpow.f32 %v259, 0.45454547
        %v324 = vpow.f32 %v260, 0.45454547
        %v325 = vpow.f32 %v261, 0.45454547
        %v326 = vpow.f32 %v262, 0.45454547
        %v327 = vpow.f32 %v263, 0.45454547
        %v328 = vpow.f32 %v264, 0.45454547
        %v329 = vpow.f32 %v265, 0.45454547
        %v330 = vpow.f32 %v266, 0.45454547
        %v331 = vpow.f32 %v267, 0.45454547
        %332 = vst [vmem:[%s137] sm:$0xff] %v268
        %333 = vst [vmem:[%s137 + $0x8] sm:$0xff] %v269
        %334 = vst [vmem:[%s137 + $0x10] sm:$0xff] %v270
        %335 = vst [vmem:[%s137 + $0x18] sm:$0xff] %v271
        %336 = vst [vmem:[%s137 + $0x20] sm:$0xff] %v272
        %337 = vst [vmem:[%s137 + $0x28] sm:$0xff] %v273
        %338 = vst [vmem:[%s137 + $0x30] sm:$0xff] %v274
        %339 = vst [vmem:[%s137 + $0x38] sm:$0xff] %v275
        %340 = vst [vmem:[%s137 + $0x40] sm:$0xff] %v276
        %341 = vst [vmem:[%s137 + $0x48] sm:$0xff] %v277
        %342 = vst [vmem:[%s137 + $0x50] sm:$0xff] %v278
        %343 = vst [vmem:[%s137 + $0x58] sm:$0xff] %v279
        %344 = vst [vmem:[%s137 + $0x60] sm:$0xff] %v280
        %345 = vst [vmem:[%s137 + $0x68] sm:$0xff] %v281
        %346 = vst [vmem:[%s137 + $0x70] sm:$0xff] %v282
        %347 = vst [vmem:[%s137 + $0x78] sm:$0xff] %v283
        %348 = vst [vmem:[%s137 + $0x80] sm:$0xff] %v284
        %349 = vst [vmem:[%s137 + $0x88] sm:$0xff] %v285
        %350 = vst [vmem:[%s137 + $0x90] sm:$0xff] %v286
        %351 = vst [vmem:[%s137 + $0x98] sm:$0xff] %v287
        %352 = vst [vmem:[%s137 + $0xa0] sm:$0xff] %v288
        %353 = vst [vmem:[%s137 + $0xa8] sm:$0xff] %v289
        %354 = vst [vmem:[%s137 + $0xb0] sm:$0xff] %v290
        %355 = vst [vmem:[%s137 + $0xb8] sm:$0xff] %v291
        %356 = vst [vmem:[%s137 + $0xc0] sm:$0xff] %v292
        %357 = vst [vmem:[%s137 + $0xc8] sm:$0xff] %v293
        %358 = vst [vmem:[%s137 + $0xd0] sm:$0xff] %v294
        %359 = vst [vmem:[%s137 + $0xd8] sm:$0xff] %v295
        %360 = vst [vmem:[%s137 + $0xe0] sm:$0xff] %v296
        %361 = vst [vmem:[%s137 + $0xe8] sm:$0xff] %v297
        %362 = vst [vmem:[%s137 + $0xf0] sm:$0xff] %v298
        %363 = vst [vmem:[%s137 + $0xf8] sm:$0xff] %v299
        %364 = vst [vmem:[%s137 + $0x100] sm:$0xff] %v300
        %365 = vst [vmem:[%s137 + $0x108] sm:$0xff] %v301
        %366 = vst [vmem:[%s137 + $0x110] sm:$0xff] %v302
        %367 = vst [vmem:[%s137 + $0x118] sm:$0xff] %v303
        %368 = vst [vmem:[%s137 + $0x120] sm:$0xff] %v304
        %369 = vst [vmem:[%s137 + $0x128] sm:$0xff] %v305
        %370 = vst [vmem:[%s137 + $0x130] sm:$0xff] %v306
        %371 = vst [vmem:[%s137 + $0x138] sm:$0xff] %v307
        %372 = vst [vmem:[%s137 + $0x140] sm:$0xff] %v308
        %373 = vst [vmem:[%s137 + $0x148] sm:$0xff] %v309
        %374 = vst [vmem:[%s137 + $0x150] sm:$0xff] %v310
        %375 = vst [vmem:[%s137 + $0x158] sm:$0xff] %v311
        %376 = vst [vmem:[%s137 + $0x160] sm:$0xff] %v312
        %377 = vst [vmem:[%s137 + $0x168] sm:$0xff] %v313
        %378 = vst [vmem:[%s137 + $0x170] sm:$0xff] %v314
        %379 = vst [vmem:[%s137 + $0x178] sm:$0xff] %v315
        %380 = vst [vmem:[%s137 + $0x180] sm:$0xff] %v316
        %381 = vst [vmem:[%s137 + $0x188] sm:$0xff] %v317
        %382 = vst [vmem:[%s137 + $0x190] sm:$0xff] %v318
        %383 = vst [vmem:[%s137 + $0x198] sm:$0xff] %v319
        %384 = vst [vmem:[%s137 + $0x1a0] sm:$0xff] %v320
        %385 = vst [vmem:[%s137 + $0x1a8] sm:$0xff] %v321
        %386 = vst [vmem:[%s137 + $0x1b0] sm:$0xff] %v322
        %387 = vst [vmem:[%s137 + $0x1b8] sm:$0xff] %v323
        %388 = vst [vmem:[%s137 + $0x1c0] sm:$0xff] %v324
        %389 = vst [vmem:[%s137 + $0x1c8] sm:$0xff] %v325
        %390 = vst [vmem:[%s137 + $0x1d0] sm:$0xff] %v326
        %391 = vst [vmem:[%s137 + $0x1d8] sm:$0xff] %v327
        %392 = vst [vmem:[%s137 + $0x1e0] sm:$0xff] %v328
        %393 = vst [vmem:[%s137 + $0x1e8] sm:$0xff] %v329
        %394 = vst [vmem:[%s137 + $0x1f0] sm:$0xff] %v330
        %395 = vst [vmem:[%s137 + $0x1f8] sm:$0xff] %v331
        %s396 = sand.u32 %s52, 1
        %s397 = scalar_lea.sflag [#allocation4], %s396
        %s398 = sand.u32 %s52, 1
        %s399 = smul.addr %s398, 512
        %s400 = scalar_lea.vmem [#allocation5], %s399
        // Predicated region
        $region29: #{tpu_custom_call.1} parent=23 // pred_check
          %p401 = pneg %p62
        $region30: #{tpu_custom_call.1} parent=23 // pred_check_branch
          %403 = sbr.rel (%p401) target = $region32
        $region31: #{tpu_custom_call.1} parent=23 // pred_region
          %s404 = smul.u32 8, %s18
          %406 = vsyncadd %s397, 0
          %s407 = smul.addr %s404, 8
          %s408 = smul.addr %s407, 8
          %s409 = scalar_lea.hbm %s1, %s408
          %s410 = sshll.u32 %s400, 4
          %s411 = int_to_ptr.vmem [resolvable:$true] %s410
          %s412 = sshll.u32 %s409, 4
          %s413 = int_to_ptr.hbm [resolvable:$true] %s412
          %418 = dma.vmem_to_hbm [thread:$0]  %s411, 8192, %s413, %s397, 1024, 1024, 64
        $region32: #{tpu_custom_call.1} parent=23 // pred_fallthru
          _
      $region24: #{tpu_custom_call.1} parent=5 // pred_fallthru
        _
      %p419 = scmp.le.s32.totalorder 2, %s13
      // Predicated region
      $region33: #{tpu_custom_call.1} parent=5 // pred_check
        %p420 = pneg %p419
      $region34: #{tpu_custom_call.1} parent=5 // pred_check_branch
        %422 = sbr.rel (%p420) target = $region36
      $region35: #{tpu_custom_call.1} parent=5 // pred_region
        %s423 = ssub.s32 %s13, 2
        // Predicated region
        $region37: #{tpu_custom_call.1} parent=35 // pred_check
          %p424 = pneg %p68
        $region38: #{tpu_custom_call.1} parent=35 // pred_check_branch
          %426 = sbr.rel (%p424) target = $region40
        $region39: #{tpu_custom_call.1} parent=35 // pred_region
          %s427 = sand.u32 %s53, 1
          %s428 = scalar_lea.sflag [#allocation4], %s427
          %s429 = sand.u32 %s53, 1
          %s430 = smul.addr %s429, 512
          %s431 = scalar_lea.vmem [#allocation5], %s430
          %433 = dma.done %s428, 8192
        $region40: #{tpu_custom_call.1} parent=35 // pred_fallthru
          _
      $region36: #{tpu_custom_call.1} parent=5 // pred_fallthru
        _
    $region6: #{tpu_custom_call.1} parent=1 // loop_footer
      %s17 = sadd.s32 1, %s13
    $region7: #{tpu_custom_call.1} parent=1 // loop_footer_branch
      %12 = sbr.rel target = $region3
    $region8: #{tpu_custom_call.1} parent=1 // loop_exit
      _
    %434 = vsyncpa [#allocation3], 1
    %s435 = scalar_lea.sflag [#allocation3], 1
    %436 = vsyncpa %s435, 1
    %437 = vsyncpa [#allocation4], 1
    %s438 = scalar_lea.sflag [#allocation4], 1
    %439 = vsyncpa %s438, 1

</llo_original>
